<compile_context>
chip_gen: v7x
topology: tpu7x:2x2x1
jax: 0.10.0
libtpu: 0.0.40
codegen_flags: <defaults>
</compile_context>

<pallas_src>
import functools
import math

import jax
import jax.numpy as jnp
import numpy as np
from jax.experimental import pallas as pl
from jax.experimental.pallas import tpu as pltpu


# ----------------------------- in-kernel math -----------------------------

def _erf_approx(x):
    # Abramowitz & Stegun 7.1.26 (max abs err ~1.5e-7).  Needs only exp (EUP)
    # and an approximate reciprocal (EUP vrcp) -> no erf lowering dependence
    # and almost no extra VALU pressure on the widest (tm, tk) tensor.
    a1, a2, a3, a4, a5 = (0.254829592, -0.284496736, 1.421413741,
                          -1.453152027, 1.061405429)
    p = 0.3275911
    ax = jnp.abs(x)
    t = pl.reciprocal(1.0 + p * ax, approx=True)          # EUP, ~free
    poly = ((((a5 * t + a4) * t + a3) * t + a2) * t + a1) * t
    r = 1.0 - poly * jnp.exp(-ax * ax)                     # EUP exp
    return jnp.where(x >= 0.0, r, -r)


def _gelu_exact(x):
    # nn.GELU() default (approximate='none'): 0.5 * x * (1 + erf(x / sqrt(2)))
    return 0.5 * x * (1.0 + _erf_approx(x * 0.7071067811865476))


def _layernorm(h, gamma, beta, eps):
    mean = jnp.mean(h, axis=-1, keepdims=True)
    c = h - mean
    var = jnp.mean(c * c, axis=-1, keepdims=True)
    inv = jax.lax.rsqrt(var + eps)                         # EUP rsqrt
    return c * inv * gamma + beta


# ------------------------------- the kernel -------------------------------

def _add_ffn_kernel(attn_ref, x_ref, pvec_ref, b1_ref, w1_ref, w2_ref,
                    o_ref, y32_ref, ycd_ref, acc_ref, *, eps):
    # grid = (row tiles, hidden chunks); hidden (reduction) axis is innermost.
    # attn/x/o: (tm, D)      pvec: (5, D) = [g1, be1, b2, g2, be2]
    # b1: (1, tk)            w1: (D, tk) = W1^T chunk    w2: (tk, D) = W2^T chunk
    k = pl.program_id(1)
    nk = pl.num_programs(1)

    @pl.when(k == 0)
    def _init():
        # TODO(synk): nn.Dropout(0.1) is identity at inference; training-mode
        # dropout (RNG mask) is not applied here.
        h = x_ref[...].astype(jnp.float32) + attn_ref[...].astype(jnp.float32)
        g1 = pvec_ref[0:1, :]
        be1 = pvec_ref[1:2, :]
        y = _layernorm(h, g1, be1, eps)                    # (tm, D) f32
        y32_ref[...] = y                                   # residual for LN2
        ycd_ref[...] = y.astype(ycd_ref.dtype)             # MXU lhs (bf16), cast once
        acc_ref[...] = jnp.zeros_like(acc_ref)

    # FFN hidden chunk k:  u_k = GELU(y @ W1^T[:, k] + b1[k]);  acc += u_k @ W2^T[k]
    u = jnp.dot(ycd_ref[...], w1_ref[...],
                preferred_element_type=jnp.float32)        # MXU (bf16 x bf16 -> f32)
    u = _gelu_exact(u + b1_ref[...])                       # f32 elementwise
    acc_ref[...] += jnp.dot(u.astype(w2_ref.dtype), w2_ref[...],
                            preferred_element_type=jnp.float32)

    @pl.when(k == nk - 1)
    def _finalize():
        b2 = pvec_ref[2:3, :]
        g2 = pvec_ref[3:4, :]
        be2 = pvec_ref[4:5, :]
        z = acc_ref[...] + b2
        out = _layernorm(y32_ref[...] + z, g2, be2, eps)
        o_ref[...] = out.astype(o_ref.dtype)


# ------------------------------ tile sizing -------------------------------

def _round_up(v, m):
    return ((v + m - 1) // m) * m


def _vmem_caps():
    # Generation-aware: 128 MiB/TC on v5e/v6e, 64 MiB/TC on v7x.
    try:
        cap = int(pltpu.get_tpu_info().vmem_capacity_bytes)
    except Exception:  # pragma: no cover - conservative fallback
        cap = 64 * 1024 * 1024
    budget = max(8 << 20, (cap * 3) // 4)       # what we size tiles against
    limit = max(budget, (cap * 9) // 10)        # scoped-VMEM limit we request
    return budget, limit


def _pick_tiles(N, D, H, io_bytes, cd_bytes, budget):
    # Hidden-dim chunk tk: stream double-buffered (D,tk)+(tk,D) weight chunks
    # within ~1/3 of the budget; tk must be a multiple of 128 dividing H.
    w_chunk_cap = budget // 3
    tk = H
    if 4 * D * H * cd_bytes > w_chunk_cap and H % 128 == 0:
        tk = ((w_chunk_cap // (4 * D * cd_bytes)) // 128) * 128
        tk = max(tk, 128)
        while tk > 128 and H % tk != 0:
            tk -= 128
        if H % tk != 0:
            tk = H
    w_bytes = 4 * D * tk * cd_bytes + 2 * tk * 4 + 2 * 8 * D * 4

    # Row tile tm: double-buffered attn/x/out tiles + persistent scratch
    # (y32, ycd, acc) + ~3 (tm, tk) f32 temporaries for the GELU path.
    per_row = (4 * D * io_bytes          # attn + x, double-buffered
               + 2 * D * io_bytes        # output, double-buffered
               + D * (8 + cd_bytes)      # y32(f32) + acc(f32) + ycd(compute)
               + 3 * tk * 4)             # hidden-chunk temporaries
    tm = ((budget - w_bytes) // per_row) if budget > w_bytes else 8
    tm = (tm // 8) * 8
    tm = int(min(max(tm, 8), 1024))      # 512-1024 rows when budget permits
    # keep >= ~8 row tiles so both v7x TensorCores get pipelined work
    tm = min(tm, max(8, _round_up(-(-N // 8), 8)))
    tm = min(tm, _round_up(N, 8))
    return tm, tk


# -------------------------------- wrapper ----------------------------------

def add_and_ffn_forward(attn, x, params, *, eps=1e-5, tm=None, tk=None,
                        compute_dtype=jnp.bfloat16):
    """attn, x: (..., D). Returns an array of the same shape / dtype as x."""
    orig_shape = x.shape
    D = orig_shape[-1]
    H = params["w1"].shape[0]                       # 4 * D
    N = int(np.prod(orig_shape[:-1]))

    xf = x.reshape(N, D)
    af = attn.reshape(N, D)

    io_bytes = jnp.dtype(x.dtype).itemsize
    cd_bytes = jnp.dtype(compute_dtype).itemsize
    budget, vmem_limit = _vmem_caps()
    auto_tm, auto_tk = _pick_tiles(N, D, H, io_bytes, cd_bytes, budget)
    tm = auto_tm if tm is None else max(8, (int(tm) // 8) * 8)
    tk = auto_tk if tk is None else int(tk)
    assert H % tk == 0, "hidden chunk must divide 4*d_model"

    # Weights shipped pre-transposed and in the MXU compute dtype (bf16 by
    # default): native MXU path, half the weight HBM/VMEM footprint, no
    # per-step in-kernel casts of the weight blocks.
    w1T = params["w1"].T.astype(compute_dtype)                # (D, H)
    w2T = params["w2"].T.astype(compute_dtype)                # (H, D)
    b1 = params["b1"].reshape(1, H).astype(jnp.float32)       # (1, H)
    # Small per-channel vectors packed into one (5, D) f32 block:
    #   rows = [ln1_gamma, ln1_beta, linear2_bias, ln2_gamma, ln2_beta]
    pvec = jnp.stack([params["g1"], params["be1"], params["b2"],
                      params["g2"], params["be2"]], axis=0).astype(jnp.float32)

    # No input padding: the ragged last row tile is handled by Pallas
    # (row-local garbage in OOB reads; OOB writes dropped).
    grid = (pl.cdiv(N, tm), H // tk)

    kernel = functools.partial(_add_ffn_kernel, eps=eps)

    out = pl.pallas_call(
        kernel,
        out_shape=jax.ShapeDtypeStruct((N, D), x.dtype),
        grid=grid,
        in_specs=[
            pl.BlockSpec((tm, D), lambda i, k: (i, 0)),   # attn rows
            pl.BlockSpec((tm, D), lambda i, k: (i, 0)),   # x rows
            pl.BlockSpec((5, D), lambda i, k: (0, 0)),    # packed LN/bias vectors
            pl.BlockSpec((1, tk), lambda i, k: (0, k)),   # b1 chunk
            pl.BlockSpec((D, tk), lambda i, k: (0, k)),   # W1^T chunk (streamed)
            pl.BlockSpec((tk, D), lambda i, k: (k, 0)),   # W2^T chunk (streamed)
        ],
        out_specs=pl.BlockSpec((tm, D), lambda i, k: (i, 0)),
        scratch_shapes=[
            pltpu.VMEM((tm, D), jnp.float32),     # y (f32) residual for LN2
            pltpu.VMEM((tm, D), compute_dtype),   # y (compute dtype) MXU lhs
            pltpu.VMEM((tm, D), jnp.float32),     # FFN output accumulator
        ],
        compiler_params=pltpu.CompilerParams(
            dimension_semantics=("parallel", "arbitrary"),
            vmem_limit_bytes=int(vmem_limit)),
    )(af, xf, pvec, b1, w1T, w2T)

    return out.reshape(orig_shape)


# ------------------------------- reference ---------------------------------

def _ln_ref(h, gamma, beta, eps):
    mean = h.mean(-1, keepdims=True)
    var = ((h - mean) ** 2).mean(-1, keepdims=True)
    return (h - mean) / jnp.sqrt(var + eps) * gamma + beta


def _reference(attn, x, params, eps=1e-5):
    h = x + attn                                    # dropout = identity (eval)
    y = _ln_ref(h, params["g1"], params["be1"], eps)
    u = jax.nn.gelu(y @ params["w1"].T + params["b1"], approximate=False)
    z = u @ params["w2"].T + params["b2"]
    return _ln_ref(y + z, params["g2"], params["be2"], eps)


if __name__ == "__main__":
    B, L, C, D = 2, 4, 16, 32       # d_model = 32, N = B*L*C = 128 rows
    H = 4 * D                       # 128 (lane-dense hidden width)

    key = jax.random.PRNGKey(0)
    ks = jax.random.split(key, 10)

    bound1 = 1.0 / math.sqrt(D)
    bound2 = 1.0 / math.sqrt(H)
    params = {
        "w1": jax.random.uniform(ks[0], (H, D), jnp.float32, -bound1, bound1),
        "b1": jax.random.uniform(ks[1], (H,), jnp.float32, -bound1, bound1),
        "w2": jax.random.uniform(ks[2], (D, H), jnp.float32, -bound2, bound2),
        "b2": jax.random.uniform(ks[3], (D,), jnp.float32, -bound2, bound2),
        "g1": 1.0 + 0.1 * jax.random.normal(ks[4], (D,), jnp.float32),
        "be1": 0.1 * jax.random.normal(ks[5], (D,), jnp.float32),
        "g2": 1.0 + 0.1 * jax.random.normal(ks[6], (D,), jnp.float32),
        "be2": 0.1 * jax.random.normal(ks[7], (D,), jnp.float32),
    }

    attn = jax.random.normal(ks[8], (B, L, C, D), jnp.float32)
    x = jax.random.normal(ks[9], (B, L, C, D), jnp.float32)

    # Default heuristic -> tm=16 here, i.e. grid=(8, 1): >= 8 row tiles so a
    # v7x megacore keeps both TensorCores' DMA pipelines full.
    out = add_and_ffn_forward(attn, x, params)       # bf16 MXU path (default)
    out = jax.block_until_ready(out)

    ref = jax.block_until_ready(_reference(attn, x, params))
    assert out.shape == (B, L, C, D)
    assert bool(jnp.isfinite(out).all())
    # bf16 matmul operands -> compare at bf16-level tolerance.
    assert np.allclose(np.asarray(out), np.asarray(ref), atol=3e-2, rtol=3e-2)

    print("KERNEL_OK")
</pallas_src>

<mosaic_0001>
module attributes {stable_mosaic.version = 11 : i64} {
  func.func @_add_ffn_kernel(%arg0: i32, %arg1: i32, %arg2: memref<16x32xf32, #tpu.memory_space<vmem>>, %arg3: memref<16x32xf32, #tpu.memory_space<vmem>>, %arg4: memref<5x32xf32, #tpu.memory_space<vmem>>, %arg5: memref<1x128xf32, #tpu.memory_space<vmem>>, %arg6: memref<32x128xbf16, #tpu.memory_space<vmem>>, %arg7: memref<128x32xbf16, #tpu.memory_space<vmem>>, %arg8: memref<16x32xf32, #tpu.memory_space<vmem>>, %arg9: memref<16x32xf32, #tpu.memory_space<vmem>>, %arg10: memref<16x32xbf16, #tpu.memory_space<vmem>>, %arg11: memref<16x32xf32, #tpu.memory_space<vmem>>) attributes {dimension_semantics = [#tpu.dimension_semantics<parallel>, #tpu.dimension_semantics<arbitrary>], iteration_bounds = array<i64: 8, 1>, scalar_prefetch = 0 : i64, scratch_operands = 3 : i64, tpu.core_type = #tpu.core_type<tc>, window_params = [{transform_indices = @transform_0, window_bounds = array<i64: 16, 32>}, {transform_indices = @transform_1, window_bounds = array<i64: 16, 32>}, {pipeline_mode = #tpu.pipeline_mode<synchronous>, transform_indices = @transform_2, window_bounds = array<i64: 5, 32>}, {transform_indices = @transform_3, window_bounds = array<i64: 1, 128>}, {transform_indices = @transform_4, window_bounds = array<i64: 32, 128>}, {transform_indices = @transform_5, window_bounds = array<i64: 128, 32>}, {transform_indices = @transform_6, window_bounds = array<i64: 16, 32>}]} {
    %c0_i32 = arith.constant 0 : i32
    %0 = arith.cmpi eq, %arg1, %c0_i32 : i32
    %1 = arith.extui %0 : i1 to i32
    %c0_i32_0 = arith.constant 0 : i32
    %2 = arith.cmpi ne, %1, %c0_i32_0 : i32
    scf.if %2 {
      %c0_29 = arith.constant 0 : index
      %c0_30 = arith.constant 0 : index
      %57 = vector.load %arg3[%c0_29, %c0_30] : memref<16x32xf32, #tpu.memory_space<vmem>>, vector<16x32xf32>
      %c0_31 = arith.constant 0 : index
      %c0_32 = arith.constant 0 : index
      %58 = vector.load %arg2[%c0_31, %c0_32] : memref<16x32xf32, #tpu.memory_space<vmem>>, vector<16x32xf32>
      %59 = arith.addf %57, %58 : vector<16x32xf32>
      %c0_33 = arith.constant 0 : index
      %c0_34 = arith.constant 0 : index
      %60 = vector.load %arg4[%c0_33, %c0_34] : memref<5x32xf32, #tpu.memory_space<vmem>>, vector<1x32xf32>
      %c1 = arith.constant 1 : index
      %c0_35 = arith.constant 0 : index
      %61 = vector.load %arg4[%c1, %c0_35] : memref<5x32xf32, #tpu.memory_space<vmem>>, vector<1x32xf32>
      %cst_36 = arith.constant dense<0.000000e+00> : vector<16xf32>
      %62 = vector.multi_reduction <add>, %59, %cst_36 [1] : vector<16x32xf32> to vector<16xf32>
      %63 = vector.shape_cast %62 : vector<16xf32> to vector<16x1xf32>
      %cst_37 = arith.constant 3.200000e+01 : f32
      %64 = vector.broadcast %cst_37 : f32 to vector<16x1xf32>
      %65 = arith.divf %63, %64 : vector<16x1xf32>
      %66 = vector.broadcast %65 : vector<16x1xf32> to vector<16x32xf32>
      %67 = arith.subf %59, %66 : vector<16x32xf32>
      %68 = arith.mulf %67, %67 : vector<16x32xf32>
      %cst_38 = arith.constant dense<0.000000e+00> : vector<16xf32>
      %69 = vector.multi_reduction <add>, %68, %cst_38 [1] : vector<16x32xf32> to vector<16xf32>
      %70 = vector.shape_cast %69 : vector<16xf32> to vector<16x1xf32>
      %cst_39 = arith.constant 3.200000e+01 : f32
      %71 = vector.broadcast %cst_39 : f32 to vector<16x1xf32>
      %72 = arith.divf %70, %71 : vector<16x1xf32>
      %cst_40 = arith.constant 9.99999974E-6 : f32
      %73 = vector.broadcast %cst_40 : f32 to vector<16x1xf32>
      %74 = arith.addf %72, %73 : vector<16x1xf32>
      %75 = math.rsqrt %74 : vector<16x1xf32>
      %76 = vector.broadcast %75 : vector<16x1xf32> to vector<16x32xf32>
      %77 = arith.mulf %67, %76 : vector<16x32xf32>
      %78 = vector.broadcast %60 : vector<1x32xf32> to vector<16x32xf32>
      %79 = arith.mulf %77, %78 : vector<16x32xf32>
      %80 = vector.broadcast %61 : vector<1x32xf32> to vector<16x32xf32>
      %81 = arith.addf %79, %80 : vector<16x32xf32>
      %c0_41 = arith.constant 0 : index
      %c0_42 = arith.constant 0 : index
      %82 = vector.load %arg9[%c0_41, %c0_42] : memref<16x32xf32, #tpu.memory_space<vmem>>, vector<16x32xf32>
      tpu.vector_store %arg9[%c0_41, %c0_42], %81 {strides = array<i32>} : memref<16x32xf32, #tpu.memory_space<vmem>>, vector<16x32xf32>,
      %83 = arith.truncf %81 : vector<16x32xf32> to vector<16x32xbf16>
      %c0_43 = arith.constant 0 : index
      %c0_44 = arith.constant 0 : index
      %84 = vector.load %arg10[%c0_43, %c0_44] : memref<16x32xbf16, #tpu.memory_space<vmem>>, vector<16x32xbf16>
      tpu.vector_store %arg10[%c0_43, %c0_44], %83 {strides = array<i32>} : memref<16x32xbf16, #tpu.memory_space<vmem>>, vector<16x32xbf16>,
      %cst_45 = arith.constant 0.000000e+00 : f32
      %85 = vector.broadcast %cst_45 : f32 to vector<16x32xf32>
      %c0_46 = arith.constant 0 : index
      %c0_47 = arith.constant 0 : index
      %86 = vector.load %arg11[%c0_46, %c0_47] : memref<16x32xf32, #tpu.memory_space<vmem>>, vector<16x32xf32>
      tpu.vector_store %arg11[%c0_46, %c0_47], %85 {strides = array<i32>} : memref<16x32xf32, #tpu.memory_space<vmem>>, vector<16x32xf32>,
    } else {
    }
    %c0 = arith.constant 0 : index
    %c0_1 = arith.constant 0 : index
    %3 = vector.load %arg10[%c0, %c0_1] : memref<16x32xbf16, #tpu.memory_space<vmem>>, vector<16x32xbf16>
    %c0_2 = arith.constant 0 : index
    %c0_3 = arith.constant 0 : index
    %4 = vector.load %arg6[%c0_2, %c0_3] : memref<32x128xbf16, #tpu.memory_space<vmem>>, vector<32x128xbf16>
    %cst = arith.constant dense<0.000000e+00> : vector<16x128xf32>
    %5 = tpu.matmul %3, %4, %cst {dimension_numbers = #tpu.dot_dimension_numbers<[1], [0], [0], [1], [0, 0, 1, 1], [], []>} : vector<16x32xbf16>, vector<32x128xbf16>, vector<16x128xf32> -> vector<16x128xf32>
    %c0_4 = arith.constant 0 : index
    %c0_5 = arith.constant 0 : index
    %6 = vector.load %arg5[%c0_4, %c0_5] : memref<1x128xf32, #tpu.memory_space<vmem>>, vector<1x128xf32>
    %7 = vector.broadcast %6 : vector<1x128xf32> to vector<16x128xf32>
    %8 = arith.addf %5, %7 : vector<16x128xf32>
    %cst_6 = arith.constant 5.000000e-01 : f32
    %9 = vector.broadcast %cst_6 : f32 to vector<16x128xf32>
    %10 = arith.mulf %9, %8 : vector<16x128xf32>
    %cst_7 = arith.constant 0.707106769 : f32
    %11 = vector.broadcast %cst_7 : f32 to vector<16x128xf32>
    %12 = arith.mulf %8, %11 : vector<16x128xf32>
    %13 = math.absf %12 : vector<16x128xf32>
    %cst_8 = arith.constant 0.327591091 : f32
    %14 = vector.broadcast %cst_8 : f32 to vector<16x128xf32>
    %15 = arith.mulf %14, %13 : vector<16x128xf32>
    %cst_9 = arith.constant 1.000000e+00 : f32
    %16 = vector.broadcast %cst_9 : f32 to vector<16x128xf32>
    %17 = arith.addf %16, %15 : vector<16x128xf32>
    %18 = tpu.reciprocal %17 {approx = true} : vector<16x128xf32> -> vector<16x128xf32>
    %cst_10 = arith.constant 1.06140542 : f32
    %19 = vector.broadcast %cst_10 : f32 to vector<16x128xf32>
    %20 = arith.mulf %19, %18 : vector<16x128xf32>
    %cst_11 = arith.constant -1.45315206 : f32
    %21 = vector.broadcast %cst_11 : f32 to vector<16x128xf32>
    %22 = arith.addf %20, %21 : vector<16x128xf32>
    %23 = arith.mulf %22, %18 : vector<16x128xf32>
    %cst_12 = arith.constant 1.42141378 : f32
    %24 = vector.broadcast %cst_12 : f32 to vector<16x128xf32>
    %25 = arith.addf %23, %24 : vector<16x128xf32>
    %26 = arith.mulf %25, %18 : vector<16x128xf32>
    %cst_13 = arith.constant -0.284496725 : f32
    %27 = vector.broadcast %cst_13 : f32 to vector<16x128xf32>
    %28 = arith.addf %26, %27 : vector<16x128xf32>
    %29 = arith.mulf %28, %18 : vector<16x128xf32>
    %cst_14 = arith.constant 0.254829586 : f32
    %30 = vector.broadcast %cst_14 : f32 to vector<16x128xf32>
    %31 = arith.addf %29, %30 : vector<16x128xf32>
    %32 = arith.mulf %31, %18 : vector<16x128xf32>
    %cst_15 = arith.constant 0.000000e+00 : f32
    %33 = vector.broadcast %cst_15 : f32 to vector<16x128xf32>
    %34 = arith.subf %33, %13 : vector<16x128xf32>
    %35 = arith.mulf %34, %13 : vector<16x128xf32>
    %36 = math.exp %35 : vector<16x128xf32>
    %37 = arith.mulf %32, %36 : vector<16x128xf32>
    %cst_16 = arith.constant 1.000000e+00 : f32
    %38 = vector.broadcast %cst_16 : f32 to vector<16x128xf32>
    %39 = arith.subf %38, %37 : vector<16x128xf32>
    %cst_17 = arith.constant 0.000000e+00 : f32
    %40 = vector.broadcast %cst_17 : f32 to vector<16x128xf32>
    %41 = arith.cmpf oge, %12, %40 : vector<16x128xf32>
    %cst_18 = arith.constant 0.000000e+00 : f32
    %42 = vector.broadcast %cst_18 : f32 to vector<16x128xf32>
    %43 = arith.subf %42, %39 : vector<16x128xf32>
    %44 = arith.select %41, %39, %43 : vector<16x128xi1>, vector<16x128xf32>
    %cst_19 = arith.constant 1.000000e+00 : f32
    %45 = vector.broadcast %cst_19 : f32 to vector<16x128xf32>
    %46 = arith.addf %45, %44 : vector<16x128xf32>
    %47 = arith.mulf %10, %46 : vector<16x128xf32>
    %c0_20 = arith.constant 0 : index
    %c0_21 = arith.constant 0 : index
    %48 = vector.load %arg11[%c0_20, %c0_21] : memref<16x32xf32, #tpu.memory_space<vmem>>, vector<16x32xf32>
    %49 = arith.truncf %47 : vector<16x128xf32> to vector<16x128xbf16>
    %c0_22 = arith.constant 0 : index
    %c0_23 = arith.constant 0 : index
    %50 = vector.load %arg7[%c0_22, %c0_23] : memref<128x32xbf16, #tpu.memory_space<vmem>>, vector<128x32xbf16>
    %cst_24 = arith.constant dense<0.000000e+00> : vector<16x32xf32>
    %51 = tpu.matmul %49, %50, %cst_24 {dimension_numbers = #tpu.dot_dimension_numbers<[1], [0], [0], [1], [0, 0, 1, 1], [], []>} : vector<16x128xbf16>, vector<128x32xbf16>, vector<16x32xf32> -> vector<16x32xf32>
    %52 = arith.addf %48, %51 : vector<16x32xf32>
    %c0_25 = arith.constant 0 : index
    %c0_26 = arith.constant 0 : index
    %53 = vector.load %arg11[%c0_25, %c0_26] : memref<16x32xf32, #tpu.memory_space<vmem>>, vector<16x32xf32>
    tpu.vector_store %arg11[%c0_25, %c0_26], %52 {strides = array<i32>} : memref<16x32xf32, #tpu.memory_space<vmem>>, vector<16x32xf32>,
    %c0_i32_27 = arith.constant 0 : i32
    %54 = arith.cmpi eq, %arg1, %c0_i32_27 : i32
    %55 = arith.extui %54 : i1 to i32
    %c0_i32_28 = arith.constant 0 : i32
    %56 = arith.cmpi ne, %55, %c0_i32_28 : i32
    scf.if %56 {
      %c2 = arith.constant 2 : index
      %c0_29 = arith.constant 0 : index
      %57 = vector.load %arg4[%c2, %c0_29] : memref<5x32xf32, #tpu.memory_space<vmem>>, vector<1x32xf32>
      %c3 = arith.constant 3 : index
      %c0_30 = arith.constant 0 : index
      %58 = vector.load %arg4[%c3, %c0_30] : memref<5x32xf32, #tpu.memory_space<vmem>>, vector<1x32xf32>
      %c4 = arith.constant 4 : index
      %c0_31 = arith.constant 0 : index
      %59 = vector.load %arg4[%c4, %c0_31] : memref<5x32xf32, #tpu.memory_space<vmem>>, vector<1x32xf32>
      %c0_32 = arith.constant 0 : index
      %c0_33 = arith.constant 0 : index
      %60 = vector.load %arg11[%c0_32, %c0_33] : memref<16x32xf32, #tpu.memory_space<vmem>>, vector<16x32xf32>
      %61 = vector.broadcast %57 : vector<1x32xf32> to vector<16x32xf32>
      %62 = arith.addf %60, %61 : vector<16x32xf32>
      %c0_34 = arith.constant 0 : index
      %c0_35 = arith.constant 0 : index
      %63 = vector.load %arg9[%c0_34, %c0_35] : memref<16x32xf32, #tpu.memory_space<vmem>>, vector<16x32xf32>
      %64 = arith.addf %63, %62 : vector<16x32xf32>
      %cst_36 = arith.constant dense<0.000000e+00> : vector<16xf32>
      %65 = vector.multi_reduction <add>, %64, %cst_36 [1] : vector<16x32xf32> to vector<16xf32>
      %66 = vector.shape_cast %65 : vector<16xf32> to vector<16x1xf32>
      %cst_37 = arith.constant 3.200000e+01 : f32
      %67 = vector.broadcast %cst_37 : f32 to vector<16x1xf32>
      %68 = arith.divf %66, %67 : vector<16x1xf32>
      %69 = vector.broadcast %68 : vector<16x1xf32> to vector<16x32xf32>
      %70 = arith.subf %64, %69 : vector<16x32xf32>
      %71 = arith.mulf %70, %70 : vector<16x32xf32>
      %cst_38 = arith.constant dense<0.000000e+00> : vector<16xf32>
      %72 = vector.multi_reduction <add>, %71, %cst_38 [1] : vector<16x32xf32> to vector<16xf32>
      %73 = vector.shape_cast %72 : vector<16xf32> to vector<16x1xf32>
      %cst_39 = arith.constant 3.200000e+01 : f32
      %74 = vector.broadcast %cst_39 : f32 to vector<16x1xf32>
      %75 = arith.divf %73, %74 : vector<16x1xf32>
      %cst_40 = arith.constant 9.99999974E-6 : f32
      %76 = vector.broadcast %cst_40 : f32 to vector<16x1xf32>
      %77 = arith.addf %75, %76 : vector<16x1xf32>
      %78 = math.rsqrt %77 : vector<16x1xf32>
      %79 = vector.broadcast %78 : vector<16x1xf32> to vector<16x32xf32>
      %80 = arith.mulf %70, %79 : vector<16x32xf32>
      %81 = vector.broadcast %58 : vector<1x32xf32> to vector<16x32xf32>
      %82 = arith.mulf %80, %81 : vector<16x32xf32>
      %83 = vector.broadcast %59 : vector<1x32xf32> to vector<16x32xf32>
      %84 = arith.addf %82, %83 : vector<16x32xf32>
      %c0_41 = arith.constant 0 : index
      %c0_42 = arith.constant 0 : index
      %85 = vector.load %arg8[%c0_41, %c0_42] : memref<16x32xf32, #tpu.memory_space<vmem>>, vector<16x32xf32>
      tpu.vector_store %arg8[%c0_41, %c0_42], %84 {strides = array<i32>} : memref<16x32xf32, #tpu.memory_space<vmem>>, vector<16x32xf32>,
    } else {
    }
    return
  }
  func.func @transform_0(%arg0: i32, %arg1: i32) -> (i32, i32) {
    %c0_i32 = arith.constant 0 : i32
    %c0_i32_0 = arith.constant 0 : i32
    return %arg0, %c0_i32 : i32, i32
  }
  func.func @transform_1(%arg0: i32, %arg1: i32) -> (i32, i32) {
    %c0_i32 = arith.constant 0 : i32
    %c0_i32_0 = arith.constant 0 : i32
    return %arg0, %c0_i32 : i32, i32
  }
  func.func @transform_2(%arg0: i32, %arg1: i32) -> (i32, i32) {
    %c0_i32 = arith.constant 0 : i32
    %c0_i32_0 = arith.constant 0 : i32
    %c0_i32_1 = arith.constant 0 : i32
    return %c0_i32, %c0_i32_0 : i32, i32
  }
  func.func @transform_3(%arg0: i32, %arg1: i32) -> (i32, i32) {
    %c0_i32 = arith.constant 0 : i32
    %c0_i32_0 = arith.constant 0 : i32
    return %c0_i32, %arg1 : i32, i32
  }
  func.func @transform_4(%arg0: i32, %arg1: i32) -> (i32, i32) {
    %c0_i32 = arith.constant 0 : i32
    %c0_i32_0 = arith.constant 0 : i32
    return %c0_i32, %arg1 : i32, i32
  }
  func.func @transform_5(%arg0: i32, %arg1: i32) -> (i32, i32) {
    %c0_i32 = arith.constant 0 : i32
    %c0_i32_0 = arith.constant 0 : i32
    return %arg1, %c0_i32 : i32, i32
  }
  func.func @transform_6(%arg0: i32, %arg1: i32) -> (i32, i32) {
    %c0_i32 = arith.constant 0 : i32
    %c0_i32_0 = arith.constant 0 : i32
    return %arg0, %c0_i32 : i32, i32
  }
}

</mosaic_0001>

<llo_original>
// kernel: tpu_custom_call.1
$region0: #{tpu_custom_call.1}
  #allocation0 [shape = 'u32[]', space=smem, size = 0x4, offset = 0x4, fixed_abs, tag = 'smem constant byte address 0x4 - core index']
  #allocation1 [shape = 'u32[144,128]{1,0:T(1,128)}', space=vmem, size = 0x12000, scoped, tag = 'internal scratch']
  #allocation2 [shape = 'f32[16,32]{1,0:T(8,128)}', space=vmem, size = 0x2000, scoped, tag = 'scratch operand']
  #allocation3 [shape = 'bf16[16,32]{1,0:T(16,128)(2,1)}', space=vmem, size = 0x1000, scoped, tag = 'scratch operand']
  #allocation4 [shape = 'f32[16,32]{1,0:T(8,128)}', space=vmem, size = 0x2000, scoped, tag = 'scratch operand']
  %s0 = inlined_call_operand.vmem [shape: f32[128,32], index: 0, kind: input, shape index: {}]
  %s1 = inlined_call_operand.vmem [shape: f32[128,32], index: 1, kind: input, shape index: {}]
  %s2 = inlined_call_operand.vmem [shape: f32[5,32], index: 2, kind: input, shape index: {}]
  %s3 = inlined_call_operand.vmem [shape: f32[1,128], index: 3, kind: input, shape index: {}]
  %s4 = inlined_call_operand.vmem [shape: bf16[32,128], index: 4, kind: input, shape index: {}]
  %s5 = inlined_call_operand.vmem [shape: bf16[128,32], index: 5, kind: input, shape index: {}]
  %s6 = inlined_call_operand.vmem [shape: f32[128,32], index: 6, kind: output, shape index: {}]
  %s7 = sld [smem:[#allocation0]]
  $region65: #{tpu_custom_call.1} parent=0
    _
  %s9 = ssub.s32 1, %s7
  %s10 = scalar_select 0, %s9, %s7
  loop: start=0, step=1, limit=10
  $region2: #{tpu_custom_call.1} parent=0 // loop_pre_header
    _
  $region3: #{tpu_custom_call.1} parent=0 // loop_header
    %s12 = sphi 0, %s16
    %p13 = scmp.ge.s32.totalorder %s12, 10
    %s19 = sphi 0, %s31
    %s20 = sphi 0, %s27
    %s21 = sphi 0, %s19
    %s22 = sphi 0, %s20
    %s23 = sphi 0, %s21
    %s24 = sphi 0, %s22
    %s34 = sphi 0, %s36
    %s37 = sphi 0, %s34
    %s38 = sphi 0, %s37
    %s54 = sphi 0, %s38
    %s60 = sphi 0, %s62
    %s63 = sphi 0, %s60
    %s64 = sphi 0, %s63
    %s80 = sphi 0, %s64
    %s84 = sphi 0, %s84
    %s86 = sphi 0, %s84
    %s87 = sphi 0, %s86
    %s101 = sphi 0, %s87
    %s107 = sphi 0, %s109
    %s110 = sphi 0, %s107
    %s111 = sphi 0, %s110
    %s127 = sphi 0, %s111
    %s133 = sphi 0, %s135
    %s136 = sphi 0, %s133
    %s137 = sphi 0, %s136
    %s153 = sphi 0, %s137
    %s159 = sphi 0, %s161
    %s162 = sphi 0, %s159
    %s163 = sphi 0, %s162
    %s179 = sphi 0, %s163
    %s185 = sphi 0, %s187
    %s188 = sphi 0, %s185
    %s189 = sphi 0, %s188
    %s205 = sphi 0, %s189
  $region4: #{tpu_custom_call.1} parent=0 // loop_header_branch
    %15 = sbr.rel (%p13) target = $region8
  $region5: #{tpu_custom_call.1} parent=0 // loop_body
    %s17 = ssub.s32 %s12, 1
    %s18 = ssub.s32 %s12, 2
    %s25 = sadd.s32 1, %s20
    %p26 = scmp.ge.s32.totalorder %s25, 1
    %s27 = scalar_select %p26, 0, %s25
    %s28 = sadd.s32 1, %s19
    %s29 = scalar_select %p26, %s28, %s19
    %p30 = scmp.ge.s32.totalorder %s29, 8
    %s31 = scalar_select %p30, 0, %s29
    %s32 = ssub.s32 %s19, %s31
    %p33 = scmp.eq.s32.totalorder %s32, 0
    %s35 = sadd.s32 %s34, 1
    %s36 = scalar_select %p33, %s34, %s35
    %p39 = pneg %p33
    %p40 = scmp.eq.s32.totalorder %s12, 7
    %p41 = por %p39, %p40
    %p42 = scmp.ne.s32.totalorder %s34, %s37
    %p43 = scmp.eq.s32.totalorder %s12, 0
    %p44 = por %p42, %p43
    %p45 = scmp.ne.s32.totalorder %s34, %s37
    %p46 = scmp.eq.s32.totalorder %s17, 7
    %p47 = por %p45, %p46
    %p48 = scmp.ne.s32.totalorder %s37, %s38
    %p49 = scmp.eq.s32.totalorder %s17, 0
    %p50 = por %p48, %p49
    %p51 = scmp.ne.s32.totalorder %s37, %s38
    %p52 = scmp.eq.s32.totalorder %s18, 7
    %p53 = por %p51, %p52
    %p55 = scmp.ne.s32.totalorder %s38, %s54
    %p56 = scmp.eq.s32.totalorder %s18, 0
    %p57 = por %p55, %p56
    %s58 = ssub.s32 %s19, %s31
    %p59 = scmp.eq.s32.totalorder %s58, 0
    %s61 = sadd.s32 %s60, 1
    %s62 = scalar_select %p59, %s60, %s61
    %p65 = pneg %p59
    %p66 = scmp.eq.s32.totalorder %s12, 7
    %p67 = por %p65, %p66
    %p68 = scmp.ne.s32.totalorder %s60, %s63
    %p69 = scmp.eq.s32.totalorder %s12, 0
    %p70 = por %p68, %p69
    %p71 = scmp.ne.s32.totalorder %s60, %s63
    %p72 = scmp.eq.s32.totalorder %s17, 7
    %p73 = por %p71, %p72
    %p74 = scmp.ne.s32.totalorder %s63, %s64
    %p75 = scmp.eq.s32.totalorder %s17, 0
    %p76 = por %p74, %p75
    %p77 = scmp.ne.s32.totalorder %s63, %s64
    %p78 = scmp.eq.s32.totalorder %s18, 7
    %p79 = por %p77, %p78
    %p81 = scmp.ne.s32.totalorder %s64, %s80
    %p82 = scmp.eq.s32.totalorder %s18, 0
    %p83 = por %p81, %p82
    %s85 = sadd.s32 %s84, 1
    %p88 = scmp.eq.s32.totalorder %s12, 7
    %p89 = scmp.ne.s32.totalorder %s84, %s86
    %p90 = scmp.eq.s32.totalorder %s12, 0
    %p91 = por %p89, %p90
    %p92 = scmp.ne.s32.totalorder %s84, %s86
    %p93 = scmp.eq.s32.totalorder %s17, 7
    %p94 = por %p92, %p93
    %p95 = scmp.ne.s32.totalorder %s86, %s87
    %p96 = scmp.eq.s32.totalorder %s17, 0
    %p97 = por %p95, %p96
    %p98 = scmp.ne.s32.totalorder %s86, %s87
    %p99 = scmp.eq.s32.totalorder %s18, 7
    %p100 = por %p98, %p99
    %p102 = scmp.ne.s32.totalorder %s87, %s101
    %p103 = scmp.eq.s32.totalorder %s18, 0
    %p104 = por %p102, %p103
    %s105 = ssub.s32 %s20, %s27
    %p106 = scmp.eq.s32.totalorder %s105, 0
    %s108 = sadd.s32 %s107, 1
    %s109 = scalar_select %p106, %s107, %s108
    %p112 = pneg %p106
    %p113 = scmp.eq.s32.totalorder %s12, 7
    %p114 = por %p112, %p113
    %p115 = scmp.ne.s32.totalorder %s107, %s110
    %p116 = scmp.eq.s32.totalorder %s12, 0
    %p117 = por %p115, %p116
    %p118 = scmp.ne.s32.totalorder %s107, %s110
    %p119 = scmp.eq.s32.totalorder %s17, 7
    %p120 = por %p118, %p119
    %p121 = scmp.ne.s32.totalorder %s110, %s111
    %p122 = scmp.eq.s32.totalorder %s17, 0
    %p123 = por %p121, %p122
    %p124 = scmp.ne.s32.totalorder %s110, %s111
    %p125 = scmp.eq.s32.totalorder %s18, 7
    %p126 = por %p124, %p125
    %p128 = scmp.ne.s32.totalorder %s111, %s127
    %p129 = scmp.eq.s32.totalorder %s18, 0
    %p130 = por %p128, %p129
    %s131 = ssub.s32 %s20, %s27
    %p132 = scmp.eq.s32.totalorder %s131, 0
    %s134 = sadd.s32 %s133, 1
    %s135 = scalar_select %p132, %s133, %s134
    %p138 = pneg %p132
    %p139 = scmp.eq.s32.totalorder %s12, 7
    %p140 = por %p138, %p139
    %p141 = scmp.ne.s32.totalorder %s133, %s136
    %p142 = scmp.eq.s32.totalorder %s12, 0
    %p143 = por %p141, %p142
    %p144 = scmp.ne.s32.totalorder %s133, %s136
    %p145 = scmp.eq.s32.totalorder %s17, 7
    %p146 = por %p144, %p145
    %p147 = scmp.ne.s32.totalorder %s136, %s137
    %p148 = scmp.eq.s32.totalorder %s17, 0
    %p149 = por %p147, %p148
    %p150 = scmp.ne.s32.totalorder %s136, %s137
    %p151 = scmp.eq.s32.totalorder %s18, 7
    %p152 = por %p150, %p151
    %p154 = scmp.ne.s32.totalorder %s137, %s153
    %p155 = scmp.eq.s32.totalorder %s18, 0
    %p156 = por %p154, %p155
    %s157 = ssub.s32 %s20, %s27
    %p158 = scmp.eq.s32.totalorder %s157, 0
    %s160 = sadd.s32 %s159, 1
    %s161 = scalar_select %p158, %s159, %s160
    %p164 = pneg %p158
    %p165 = scmp.eq.s32.totalorder %s12, 7
    %p166 = por %p164, %p165
    %p167 = scmp.ne.s32.totalorder %s159, %s162
    %p168 = scmp.eq.s32.totalorder %s12, 0
    %p169 = por %p167, %p168
    %p170 = scmp.ne.s32.totalorder %s159, %s162
    %p171 = scmp.eq.s32.totalorder %s17, 7
    %p172 = por %p170, %p171
    %p173 = scmp.ne.s32.totalorder %s162, %s163
    %p174 = scmp.eq.s32.totalorder %s17, 0
    %p175 = por %p173, %p174
    %p176 = scmp.ne.s32.totalorder %s162, %s163
    %p177 = scmp.eq.s32.totalorder %s18, 7
    %p178 = por %p176, %p177
    %p180 = scmp.ne.s32.totalorder %s163, %s179
    %p181 = scmp.eq.s32.totalorder %s18, 0
    %p182 = por %p180, %p181
    %s183 = ssub.s32 %s19, %s31
    %p184 = scmp.eq.s32.totalorder %s183, 0
    %s186 = sadd.s32 %s185, 1
    %s187 = scalar_select %p184, %s185, %s186
    %p190 = pneg %p184
    %p191 = scmp.eq.s32.totalorder %s12, 7
    %p192 = por %p190, %p191
    %p193 = scmp.ne.s32.totalorder %s185, %s188
    %p194 = scmp.eq.s32.totalorder %s12, 0
    %p195 = por %p193, %p194
    %p196 = scmp.ne.s32.totalorder %s185, %s188
    %p197 = scmp.eq.s32.totalorder %s17, 7
    %p198 = por %p196, %p197
    %p199 = scmp.ne.s32.totalorder %s188, %s189
    %p200 = scmp.eq.s32.totalorder %s17, 0
    %p201 = por %p199, %p200
    %p202 = scmp.ne.s32.totalorder %s188, %s189
    %p203 = scmp.eq.s32.totalorder %s18, 7
    %p204 = por %p202, %p203
    %p206 = scmp.ne.s32.totalorder %s189, %s205
    %p207 = scmp.eq.s32.totalorder %s18, 0
    %p208 = por %p206, %p207
    %p209 = scmp.le.s32.totalorder 1, %s12
    %p210 = scmp.lt.s32.totalorder %s12, 9
    %p211 = pnand %p209, %p210
    %p212 = pneg %p211
    // Predicated region
    $region9: #{tpu_custom_call.1} parent=5 // pred_check
      _
    $region10: #{tpu_custom_call.1} parent=5 // pred_check_branch
      %214 = sbr.rel (%p211) target = $region12
    $region11: #{tpu_custom_call.1} parent=5 // pred_region
      %s215 = ssub.s32 %s12, 1
      // Predicated region
      $region13: #{tpu_custom_call.1} parent=11 // pred_check
        %p216 = pneg %p97
      $region14: #{tpu_custom_call.1} parent=11 // pred_check_branch
        %218 = sbr.rel (%p216) target = $region16
      $region15: #{tpu_custom_call.1} parent=11 // pred_region
        _
      $region16: #{tpu_custom_call.1} parent=11 // pred_fallthru
        _
      // Predicated region
      $region17: #{tpu_custom_call.1} parent=11 // pred_check
        %p219 = pneg %p123
      $region18: #{tpu_custom_call.1} parent=11 // pred_check_branch
        %221 = sbr.rel (%p219) target = $region20
      $region19: #{tpu_custom_call.1} parent=11 // pred_region
        %p222 = scmp.lt.s32.totalorder %s22, 0
        %s223 = scalar_select %p222, %s22, 0
        %s224 = scalar_lea.vmem %s3, %s223
      $region20: #{tpu_custom_call.1} parent=11 // pred_fallthru
        _
      // Predicated region
      $region21: #{tpu_custom_call.1} parent=11 // pred_check
        %p225 = pneg %p149
      $region22: #{tpu_custom_call.1} parent=11 // pred_check_branch
        %227 = sbr.rel (%p225) target = $region24
      $region23: #{tpu_custom_call.1} parent=11 // pred_region
        %p228 = scmp.lt.s32.totalorder %s22, 0
        %s229 = scalar_select %p228, %s22, 0
        %s230 = smul.addr %s229, 4
        %s231 = scalar_lea.vmem %s4, %s230
      $region24: #{tpu_custom_call.1} parent=11 // pred_fallthru
        _
      // Predicated region
      $region25: #{tpu_custom_call.1} parent=11 // pred_check
        %p232 = pneg %p175
      $region26: #{tpu_custom_call.1} parent=11 // pred_check_branch
        %234 = sbr.rel (%p232) target = $region28
      $region27: #{tpu_custom_call.1} parent=11 // pred_region
        %s235 = smul.u32 16, %s22
        %p236 = scmp.lt.s32.totalorder %s235, 15
        %s237 = scalar_select %p236, %s235, 15
        %s238 = smul.addr %s237, 4
        %s239 = scalar_lea.vmem %s5, %s238
        %s240 = smul.u32 16, %s22
      $region28: #{tpu_custom_call.1} parent=11 // pred_fallthru
        _
    $region12: #{tpu_custom_call.1} parent=5 // pred_fallthru
      _
    %p241 = scmp.lt.s32.totalorder %s12, 8
    // Predicated region
    $region29: #{tpu_custom_call.1} parent=5 // pred_check
      %p242 = pneg %p241
    $region30: #{tpu_custom_call.1} parent=5 // pred_check_branch
      %244 = sbr.rel (%p242) target = $region32
    $region31: #{tpu_custom_call.1} parent=5 // pred_region
      // Predicated region
      $region33: #{tpu_custom_call.1} parent=31 // pred_check
        %p245 = pneg %p44
      $region34: #{tpu_custom_call.1} parent=31 // pred_check_branch
        %247 = sbr.rel (%p245) target = $region36
      $region35: #{tpu_custom_call.1} parent=31 // pred_region
        %s248 = smul.u32 2, %s19
        %p249 = scmp.lt.s32.totalorder %s248, 15
        %s250 = scalar_select %p249, %s248, 15
        %s251 = smul.addr %s250, 8
        %s252 = scalar_lea.vmem %s0, %s251
        %s253 = smul.u32 2, %s19
      $region36: #{tpu_custom_call.1} parent=31 // pred_fallthru
        _
      // Predicated region
      $region37: #{tpu_custom_call.1} parent=31 // pred_check
        %p254 = pneg %p70
      $region38: #{tpu_custom_call.1} parent=31 // pred_check_branch
        %256 = sbr.rel (%p254) target = $region40
      $region39: #{tpu_custom_call.1} parent=31 // pred_region
        %s257 = smul.u32 2, %s19
        %p258 = scmp.lt.s32.totalorder %s257, 15
        %s259 = scalar_select %p258, %s257, 15
        %s260 = smul.addr %s259, 8
        %s261 = scalar_lea.vmem %s1, %s260
        %s262 = smul.u32 2, %s19
      $region40: #{tpu_custom_call.1} parent=31 // pred_fallthru
        _
    $region32: #{tpu_custom_call.1} parent=5 // pred_fallthru
      _
    %p263 = scmp.le.s32.totalorder 1, %s12
    %p264 = scmp.lt.s32.totalorder %s12, 9
    %p265 = pnand %p263, %p264
    %p266 = pneg %p265
    // Predicated region
    $region41: #{tpu_custom_call.1} parent=5 // pred_check
      _
    $region42: #{tpu_custom_call.1} parent=5 // pred_check_branch
      %268 = sbr.rel (%p265) target = $region44
    $region43: #{tpu_custom_call.1} parent=5 // pred_region
      %s269 = ssub.s32 %s12, 1
      %s270 = smul.u32 2, %s21
      %p271 = scmp.lt.s32.totalorder %s270, 15
      %s272 = scalar_select %p271, %s270, 15
      %s273 = smul.addr %s272, 8
      %s274 = scalar_lea.vmem %s0, %s273
      %p275 = pneg %p50
      %p276 = pneg %p47
      %s277 = smul.u32 2, %s21
      %p278 = scmp.lt.s32.totalorder %s277, 15
      %s279 = scalar_select %p278, %s277, 15
      %s280 = smul.addr %s279, 8
      %s281 = scalar_lea.vmem %s1, %s280
      %p282 = pneg %p76
      %p283 = pneg %p73
      %p284 = pneg %p97
      %p285 = pneg %p94
      %p286 = scmp.lt.s32.totalorder %s22, 0
      %s287 = scalar_select %p286, %s22, 0
      %s288 = scalar_lea.vmem %s3, %s287
      %p289 = pneg %p123
      %p290 = pneg %p120
      %p291 = scmp.lt.s32.totalorder %s22, 0
      %s292 = scalar_select %p291, %s22, 0
      %s293 = smul.addr %s292, 4
      %s294 = scalar_lea.vmem %s4, %s293
      %p295 = pneg %p149
      %p296 = pneg %p146
      %s297 = smul.u32 16, %s22
      %p298 = scmp.lt.s32.totalorder %s297, 15
      %s299 = scalar_select %p298, %s297, 15
      %s300 = smul.addr %s299, 4
      %s301 = scalar_lea.vmem %s5, %s300
      %p302 = pneg %p175
      %p303 = pneg %p172
      %p304 = pneg %p201
      %p305 = pneg %p198
      %s306 = smul.u32 2, %s21
      %p307 = scmp.lt.s32.totalorder %s306, 15
      %s308 = scalar_select %p307, %s306, 15
      %s309 = smul.addr %s308, 8
      %s310 = scalar_lea.vmem %s6, %s309
      %s311 = smul.u32 2, %s21
      %p312 = scmp.lt.s32.totalorder %s311, 15
      %s313 = scalar_select %p312, %s311, 15
      %s314 = smul.addr %s313, 8
      %s315 = scalar_lea.vmem %s0, %s314
      %s316 = smul.u32 2, %s21
      %s317 = smul.u32 2, %s21
      %p318 = scmp.lt.s32.totalorder %s317, 15
      %s319 = scalar_select %p318, %s317, 15
      %s320 = smul.addr %s319, 8
      %s321 = scalar_lea.vmem %s1, %s320
      %s322 = smul.u32 2, %s21
      %p323 = scmp.lt.s32.totalorder %s22, 0
      %s324 = scalar_select %p323, %s22, 0
      %s325 = scalar_lea.vmem %s3, %s324
      %p326 = scmp.lt.s32.totalorder %s22, 0
      %s327 = scalar_select %p326, %s22, 0
      %s328 = smul.addr %s327, 4
      %s329 = scalar_lea.vmem %s4, %s328
      %s330 = smul.u32 16, %s22
      %p331 = scmp.lt.s32.totalorder %s330, 15
      %s332 = scalar_select %p331, %s330, 15
      %s333 = smul.addr %s332, 4
      %s334 = scalar_lea.vmem %s5, %s333
      %s335 = smul.u32 16, %s22
      %s336 = smul.u32 2, %s21
      %p337 = scmp.lt.s32.totalorder %s336, 15
      %s338 = scalar_select %p337, %s336, 15
      %s339 = smul.addr %s338, 8
      %s340 = scalar_lea.vmem %s6, %s339
      %s341 = smul.u32 2, %s21
      %p343 = scmp.eq.s32.totalorder %s22, 0
      // Predicated region
      $region45: #{tpu_custom_call.1} parent=43 // pred_check
        %p344 = pneg %p343
      $region46: #{tpu_custom_call.1} parent=43 // pred_check_branch
        %346 = sbr.rel (%p344) target = $region48
      $region47: #{tpu_custom_call.1} parent=43 // pred_region
        %v347 = vld [vmem:[%s321] sm:$0xff]
        %v348 = vld [vmem:[%s321 + $0x8] sm:$0xff]
        %v349 = vld [vmem:[%s315] sm:$0xff]
        %v350 = vld [vmem:[%s315 + $0x8] sm:$0xff]
        %v351 = vadd.f32 %v347, %v349
        %v352 = vadd.f32 %v348, %v350
        %v353 = vld [vmem:[%s2] sm:$0x1]
        %v354 = vld [vmem:[%s2 + $0x1] sm:$0x1]
        %vm355 = vcmask 261120
        %v356 = vsel %vm355, %v351, 0.0
        %357 = vadd.xlane.f32.xlu0 %v356
        %v358 = vpop.xlane.xlu0 %357
        %v359 = vsel %vm355, %v352, 0.0
        %360 = vadd.xlane.f32.xlu0 %v359
        %v361 = vpop.xlane.xlu0 %360
        %v362 = vrcp.pop 32.0
        %v363 = vmul.f32 %v358, %v362
        %v364 = vmul.f32 %v361, %v362
        %v365 = vsub.f32 %v351, %v363
        %v366 = vsub.f32 %v352, %v364
        %v367 = vmul.f32 %v365, %v365
        %v368 = vmul.f32 %v366, %v366
        %v369 = vsel %vm355, %v367, 0.0
        %370 = vadd.xlane.f32.xlu0 %v369
        %v371 = vpop.xlane.xlu0 %370
        %v372 = vsel %vm355, %v368, 0.0
        %373 = vadd.xlane.f32.xlu0 %v372
        %v374 = vpop.xlane.xlu0 %373
        %v375 = vmul.f32 %v371, %v362
        %v376 = vmul.f32 %v374, %v362
        %v377 = vadd.f32 %v375, 1e-05
        %v378 = vadd.f32 %v376, 1e-05
        %v379 = vrsqrt.pop %v377
        %v380 = vrsqrt.pop %v378
        %v381 = vmul.f32 %v365, %v379
        %v382 = vmul.f32 %v366, %v380
        %v383 = vlaneseq
        %v384 = vshrl.u32 %v383, 7
        %v385 = vsub.s32 0, %v384
        %v386 = vrot.slane %v353, %v385
        %v387 = vmul.f32 %v381, %v386
        %v388 = vmul.f32 %v382, %v386
        %v389 = vlaneseq
        %v390 = vshrl.u32 %v389, 7
        %v391 = vsub.s32 0, %v390
        %v392 = vrot.slane %v354, %v391
        %v393 = vadd.f32 %v387, %v392
        %v394 = vadd.f32 %v388, %v392
        %395 = vst.msk [vmem:[#allocation2] sm:$0xff] %vm355, %v393
        %396 = vst.msk [vmem:[#allocation2 + $0x8] sm:$0xff] %vm355, %v394
        %v397 = vpack.c.bf16 %v394, %v393
        %398 = vst.msk [vmem:[#allocation3] sm:$0xff] %vm355, %v397
        %399 = vst.msk [vmem:[#allocation4] sm:$0xff] %vm355, 0.0
        %400 = vst.msk [vmem:[#allocation4 + $0x8] sm:$0xff] %vm355, 0.0
      $region48: #{tpu_custom_call.1} parent=43 // pred_fallthru
        _
      %v401 = vld [vmem:[#allocation3] sm:$0xff]
      %v402 = vld [vmem:[%s329] sm:$0xf]
      %v403 = vld [vmem:[%s329 + $0x4] sm:$0xf]
      %v404 = vld [vmem:[%s329 + $0x8] sm:$0xf]
      %v405 = vld [vmem:[%s329 + $0xc] sm:$0xf]
      %v406 = vld [vmem:[%s325] sm:$0x1]
      %v408 = vlaneseq
      %v409 = vshrl.u32 %v408, 7
      %v410 = vsub.s32 0, %v409
      %v411 = vrot.slane %v406, %v410
      %v417 = vunpack.c.l.b16 %v402
      %v418 = vunpack.c.l.b16 %v403
      %v419 = vunpack.c.l.b16 %v404
      %v420 = vunpack.c.l.b16 %v405
      %v421 = vpack.c.b16 %v418, %v417
      %v422 = vpack.c.b16 %v420, %v419
      %vm425 = vcmask 261120
      %v427 = vsel %vm425, %v401, 0
      %429 = vmatprep.subr.bf16.mxu0 0
      %430 = vmatpush1.bf16.msra.mxu0 %v421
      %431 = vmatprep.subr.bf16.mxu0 0
      %432 = vmatpush1.bf16.msra.mxu0 %v422
      %433 = vmatprep.subr.bf16.mxu0 0
      %434 = vmatpush1.bf16.msra.mxu0 0
      %435 = vmatprep.subr.bf16.mxu0 0
      %436 = vmatpush1.bf16.msra.mxu0 0
      %437 = vmatprep.subr.bf16.mxu0 0
      %438 = vmatpush1.bf16.msra.mxu0 0
      %439 = vmatprep.subr.bf16.mxu0 0
      %440 = vmatpush1.bf16.msra.mxu0 0
      %441 = vmatprep.subr.bf16.mxu0 0
      %442 = vmatpush1.bf16.msra.mxu0 0
      %443 = vmatprep.subr.bf16.mxu0 0
      %444 = vmatpush1.bf16.msra.mxu0 0
      %445 = vmatprep.subr.bf16.mxu0 0
      %446 = vmatpush1.bf16.msra.mxu0 0
      %447 = vmatprep.subr.bf16.mxu0 0
      %448 = vmatpush1.bf16.msra.mxu0 0
      %449 = vmatprep.subr.bf16.mxu0 0
      %450 = vmatpush1.bf16.msra.mxu0 0
      %451 = vmatprep.subr.bf16.mxu0 0
      %452 = vmatpush1.bf16.msra.mxu0 0
      %453 = vmatprep.subr.bf16.mxu0 0
      %454 = vmatpush1.bf16.msra.mxu0 0
      %455 = vmatprep.subr.bf16.mxu0 0
      %456 = vmatpush1.bf16.msra.mxu0 0
      %457 = vmatprep.subr.bf16.mxu0 0
      %458 = vmatpush1.bf16.msra.mxu0 0
      %459 = vmatprep.subr.bf16.mxu0 0
      %460 = vmatpush1.bf16.msra.mxu0 0
      %461 = vmatprep.mubr.bf16.mxu0 0
      %462 = vmatmul.mubr.bf16.gmra.mrb[0].mxu0 %v427
      %v463 = vpop.f32.mrb[0].mxu0
      %v464 = vadd.f32 %v411, %v463
      %v465 = vpop.f32.mrb[0].mxu0
      %v466 = vpop.f32.mrb[0].mxu0
      %v467 = vadd.f32 %v411, %v466
      %v468 = vpop.f32.mrb[0].mxu0
      %469 = vdwg.mxu0
      %v470 = vmul.f32 %v464, 0.5
      %v471 = vmul.f32 %v467, 0.5
      %v472 = vmul.f32 %v464, 0.70710677
      %v473 = vmul.f32 %v467, 0.70710677
      %v474 = vand.u32 2147483647, %v472
      %v475 = vand.u32 2147483647, %v473
      %v476 = vmul.f32 %v474, 0.3275911
      %v477 = vmul.f32 %v475, 0.3275911
      %v478 = vadd.f32 %v476, 1.0
      %v479 = vadd.f32 %v477, 1.0
      %v480 = vrcp.pop %v478
      %v481 = vrcp.pop %v479
      %v482 = vmul.f32 %v480, 1.0614054
      %v483 = vmul.f32 %v481, 1.0614054
      %v484 = vadd.f32 %v482, -1.4531521
      %v485 = vadd.f32 %v483, -1.4531521
      %v486 = vmul.f32 %v484, %v480
      %v487 = vmul.f32 %v485, %v481
      %v488 = vadd.f32 %v486, 1.4214138
      %v489 = vadd.f32 %v487, 1.4214138
      %v490 = vmul.f32 %v488, %v480
      %v491 = vmul.f32 %v489, %v481
      %v492 = vadd.f32 %v490, -0.28449672
      %v493 = vadd.f32 %v491, -0.28449672
      %v494 = vmul.f32 %v492, %v480
      %v495 = vmul.f32 %v493, %v481
      %v496 = vadd.f32 %v494, 0.2548296
      %v497 = vadd.f32 %v495, 0.2548296
      %v498 = vmul.f32 %v496, %v480
      %v499 = vmul.f32 %v497, %v481
      %v500 = vsub.f32 0.0, %v474
      %v501 = vsub.f32 0.0, %v475
      %v502 = vmul.f32 %v500, %v474
      %v503 = vmul.f32 %v501, %v475
      %v504 = vmul.f32 %v502, 1.442695
      %v505 = vpow.pop %v504
      %v506 = vmul.f32 %v503, 1.442695
      %v507 = vpow.pop %v506
      %v508 = vmul.f32 %v498, %v505
      %v509 = vmul.f32 %v499, %v507
      %v510 = vsub.f32 1.0, %v508
      %v511 = vsub.f32 1.0, %v509
      %vm512 = vcmp.ge.f32.partialorder %v472, 0.0
      %vm513 = vcmp.ge.f32.partialorder %v473, 0.0
      %v514 = vsub.f32 0.0, %v510
      %v515 = vsub.f32 0.0, %v511
      %v516 = vsel %vm512, %v510, %v514
      %v517 = vsel %vm513, %v511, %v515
      %v518 = vadd.f32 %v516, 1.0
      %v519 = vadd.f32 %v517, 1.0
      %v520 = vmul.f32 %v470, %v518
      %v521 = vmul.f32 %v471, %v519
      %v522 = vld [vmem:[#allocation4] sm:$0xff]
      %v523 = vld [vmem:[#allocation4 + $0x8] sm:$0xff]
      %v524 = vpack.c.bf16 %v521, %v520
      %v525 = vld [vmem:[%s334] sm:$0xf]
      %v526 = vld [vmem:[%s334 + $0x4] sm:$0xf]
      %v527 = vld [vmem:[%s334 + $0x8] sm:$0xf]
      %v528 = vld [vmem:[%s334 + $0xc] sm:$0xf]
      %v529 = vld [vmem:[%s334 + $0x10] sm:$0xf]
      %v530 = vld [vmem:[%s334 + $0x14] sm:$0xf]
      %v531 = vld [vmem:[%s334 + $0x18] sm:$0xf]
      %v532 = vld [vmem:[%s334 + $0x1c] sm:$0xf]
      %v533 = vld [vmem:[%s334 + $0x20] sm:$0xf]
      %v534 = vld [vmem:[%s334 + $0x24] sm:$0xf]
      %v535 = vld [vmem:[%s334 + $0x28] sm:$0xf]
      %v536 = vld [vmem:[%s334 + $0x2c] sm:$0xf]
      %v537 = vld [vmem:[%s334 + $0x30] sm:$0xf]
      %v538 = vld [vmem:[%s334 + $0x34] sm:$0xf]
      %v539 = vld [vmem:[%s334 + $0x38] sm:$0xf]
      %v540 = vld [vmem:[%s334 + $0x3c] sm:$0xf]
      %v557 = vunpack.c.l.b16 %v525
      %v558 = vunpack.c.l.b16 %v526
      %v559 = vunpack.c.l.b16 %v527
      %v560 = vunpack.c.l.b16 %v528
      %v561 = vunpack.c.l.b16 %v529
      %v562 = vunpack.c.l.b16 %v530
      %v563 = vunpack.c.l.b16 %v531
      %v564 = vunpack.c.l.b16 %v532
      %v565 = vunpack.c.l.b16 %v533
      %v566 = vunpack.c.l.b16 %v534
      %v567 = vunpack.c.l.b16 %v535
      %v568 = vunpack.c.l.b16 %v536
      %v569 = vunpack.c.l.b16 %v537
      %v570 = vunpack.c.l.b16 %v538
      %v571 = vunpack.c.l.b16 %v539
      %v572 = vunpack.c.l.b16 %v540
      %v573 = vpack.c.b16 %v558, %v557
      %v574 = vpack.c.b16 %v560, %v559
      %v575 = vpack.c.b16 %v562, %v561
      %v576 = vpack.c.b16 %v564, %v563
      %v577 = vpack.c.b16 %v566, %v565
      %v578 = vpack.c.b16 %v568, %v567
      %v579 = vpack.c.b16 %v570, %v569
      %v580 = vpack.c.b16 %v572, %v571
      %589 = vmatprep.subr.bf16.mxu0 0
      %590 = vmatpush1.bf16.msra.mxu0 %v573
      %591 = vmatprep.subr.bf16.mxu0 0
      %592 = vmatpush1.bf16.msra.mxu0 %v574
      %593 = vmatprep.subr.bf16.mxu0 0
      %594 = vmatpush1.bf16.msra.mxu0 %v575
      %595 = vmatprep.subr.bf16.mxu0 0
      %596 = vmatpush1.bf16.msra.mxu0 %v576
      %597 = vmatprep.subr.bf16.mxu0 0
      %598 = vmatpush1.bf16.msra.mxu0 %v577
      %599 = vmatprep.subr.bf16.mxu0 0
      %600 = vmatpush1.bf16.msra.mxu0 %v578
      %601 = vmatprep.subr.bf16.mxu0 0
      %602 = vmatpush1.bf16.msra.mxu0 %v579
      %603 = vmatprep.subr.bf16.mxu0 0
      %604 = vmatpush1.bf16.msra.mxu0 %v580
      %605 = vmatprep.subr.bf16.mxu0 0
      %606 = vmatpush1.bf16.msra.mxu0 0
      %607 = vmatprep.subr.bf16.mxu0 0
      %608 = vmatpush1.bf16.msra.mxu0 0
      %609 = vmatprep.subr.bf16.mxu0 0
      %610 = vmatpush1.bf16.msra.mxu0 0
      %611 = vmatprep.subr.bf16.mxu0 0
      %612 = vmatpush1.bf16.msra.mxu0 0
      %613 = vmatprep.subr.bf16.mxu0 0
      %614 = vmatpush1.bf16.msra.mxu0 0
      %615 = vmatprep.subr.bf16.mxu0 0
      %616 = vmatpush1.bf16.msra.mxu0 0
      %617 = vmatprep.subr.bf16.mxu0 0
      %618 = vmatpush1.bf16.msra.mxu0 0
      %619 = vmatprep.subr.bf16.mxu0 0
      %620 = vmatpush1.bf16.msra.mxu0 0
      %621 = vmatprep.mubr.bf16.mxu0 0
      %622 = vmatmul.mubr.bf16.gmra.mrb[0].mxu0 %v524
      %v623 = vpop.f32.mrb[0].mxu0
      %v624 = vadd.f32 0.0, %v623
      %v625 = vpop.f32.mrb[0].mxu0
      %v626 = vpop.f32.mrb[0].mxu0
      %v627 = vadd.f32 0.0, %v626
      %v628 = vpop.f32.mrb[0].mxu0
      %629 = vdwg.mxu0
      %v630 = vadd.f32 %v522, %v624
      %v631 = vadd.f32 %v523, %v627
      %632 = vst.msk [vmem:[#allocation4] sm:$0xff] %vm425, %v630
      %633 = vst.msk [vmem:[#allocation4 + $0x8] sm:$0xff] %vm425, %v631
      // Predicated region
      $region49: #{tpu_custom_call.1} parent=43 // pred_check
        %p634 = pneg %p343
      $region50: #{tpu_custom_call.1} parent=43 // pred_check_branch
        %636 = sbr.rel (%p634) target = $region52
      $region51: #{tpu_custom_call.1} parent=43 // pred_region
        %v637 = vld [vmem:[%s2 + $0x2] sm:$0x1]
        %v638 = vld [vmem:[%s2 + $0x3] sm:$0x1]
        %v639 = vld [vmem:[%s2 + $0x4] sm:$0x1]
        %v640 = vld [vmem:[#allocation4] sm:$0xff]
        %v641 = vld [vmem:[#allocation4 + $0x8] sm:$0xff]
        %v642 = vlaneseq
        %v643 = vshrl.u32 %v642, 7
        %v644 = vsub.s32 0, %v643
        %v645 = vrot.slane %v637, %v644
        %v646 = vadd.f32 %v640, %v645
        %v647 = vadd.f32 %v641, %v645
        %v648 = vld [vmem:[#allocation2] sm:$0xff]
        %v649 = vld [vmem:[#allocation2 + $0x8] sm:$0xff]
        %v650 = vadd.f32 %v648, %v646
        %v651 = vadd.f32 %v649, %v647
        %v652 = vsel %vm425, %v650, 0.0
        %653 = vadd.xlane.f32.xlu0 %v652
        %v654 = vpop.xlane.xlu0 %653
        %v655 = vsel %vm425, %v651, 0.0
        %656 = vadd.xlane.f32.xlu0 %v655
        %v657 = vpop.xlane.xlu0 %656
        %v658 = vrcp.pop 32.0
        %v659 = vmul.f32 %v654, %v658
        %v660 = vmul.f32 %v657, %v658
        %v661 = vsub.f32 %v650, %v659
        %v662 = vsub.f32 %v651, %v660
        %v663 = vmul.f32 %v661, %v661
        %v664 = vmul.f32 %v662, %v662
        %v665 = vsel %vm425, %v663, 0.0
        %666 = vadd.xlane.f32.xlu0 %v665
        %v667 = vpop.xlane.xlu0 %666
        %v668 = vsel %vm425, %v664, 0.0
        %669 = vadd.xlane.f32.xlu0 %v668
        %v670 = vpop.xlane.xlu0 %669
        %v671 = vmul.f32 %v667, %v658
        %v672 = vmul.f32 %v670, %v658
        %v673 = vadd.f32 %v671, 1e-05
        %v674 = vadd.f32 %v672, 1e-05
        %v675 = vrsqrt.pop %v673
        %v676 = vrsqrt.pop %v674
        %v677 = vmul.f32 %v661, %v675
        %v678 = vmul.f32 %v662, %v676
        %v679 = vlaneseq
        %v680 = vshrl.u32 %v679, 7
        %v681 = vsub.s32 0, %v680
        %v682 = vrot.slane %v638, %v681
        %v683 = vmul.f32 %v677, %v682
        %v684 = vmul.f32 %v678, %v682
        %v685 = vlaneseq
        %v686 = vshrl.u32 %v685, 7
        %v687 = vsub.s32 0, %v686
        %v688 = vrot.slane %v639, %v687
        %v689 = vadd.f32 %v683, %v688
        %v690 = vadd.f32 %v684, %v688
        %691 = vst.msk [vmem:[%s340] sm:$0xff] %vm425, %v689
        %692 = vst.msk [vmem:[%s340 + $0x8] sm:$0xff] %vm425, %v690
      $region52: #{tpu_custom_call.1} parent=43 // pred_fallthru
        _
      %s693 = smul.u32 2, %s21
      %p694 = scmp.lt.s32.totalorder %s693, 15
      %s695 = scalar_select %p694, %s693, 15
      %s696 = smul.addr %s695, 8
      %s697 = scalar_lea.vmem %s6, %s696
      // Predicated region
      $region53: #{tpu_custom_call.1} parent=43 // pred_check
        %p698 = pneg %p198
      $region54: #{tpu_custom_call.1} parent=43 // pred_check_branch
        %700 = sbr.rel (%p698) target = $region56
      $region55: #{tpu_custom_call.1} parent=43 // pred_region
        %s701 = smul.u32 2, %s21
      $region56: #{tpu_custom_call.1} parent=43 // pred_fallthru
        _
    $region44: #{tpu_custom_call.1} parent=5 // pred_fallthru
      _
    %p702 = scmp.le.s32.totalorder 2, %s12
    // Predicated region
    $region57: #{tpu_custom_call.1} parent=5 // pred_check
      %p703 = pneg %p702
    $region58: #{tpu_custom_call.1} parent=5 // pred_check_branch
      %705 = sbr.rel (%p703) target = $region60
    $region59: #{tpu_custom_call.1} parent=5 // pred_region
      %s706 = ssub.s32 %s12, 2
      // Predicated region
      $region61: #{tpu_custom_call.1} parent=59 // pred_check
        %p707 = pneg %p204
      $region62: #{tpu_custom_call.1} parent=59 // pred_check_branch
        %709 = sbr.rel (%p707) target = $region64
      $region63: #{tpu_custom_call.1} parent=59 // pred_region
        %s710 = smul.u32 2, %s23
        %p711 = scmp.lt.s32.totalorder %s710, 15
        %s712 = scalar_select %p711, %s710, 15
        %s713 = smul.addr %s712, 8
        %s714 = scalar_lea.vmem %s6, %s713
      $region64: #{tpu_custom_call.1} parent=59 // pred_fallthru
        _
    $region60: #{tpu_custom_call.1} parent=5 // pred_fallthru
      _
  $region6: #{tpu_custom_call.1} parent=0 // loop_footer
    %s16 = sadd.s32 1, %s12
  $region7: #{tpu_custom_call.1} parent=0 // loop_footer_branch
    %11 = sbr.rel target = $region3
  $region8: #{tpu_custom_call.1} parent=0 // loop_exit
    _

</llo_original>
